<compile_context>
chip_gen: v7x
topology: tpu7x:2x2x1
jax: 0.10.0
libtpu: 0.0.40
codegen_flags: <defaults>
</compile_context>

<pallas_src>
import functools

import jax
import jax.numpy as jnp
from jax import lax
from jax.experimental import pallas as pl
from jax.experimental.pallas import tpu as pltpu


def gru_fc_kernel(tok_ref, proj_ref, whh_ref, bhh_ref, wfc_ref, bfc_ref,
                  out_ref, *, T, B, H):
    """GRU recurrence + final Linear, everything VMEM/SMEM resident.

    tok_ref : (B, T) int32 in SMEM           -- token ids
    proj_ref: (VOCAB, 1, G) f32 in VMEM      -- emb @ W_ih + b_ih, gate-packed
    whh_ref : (H, G) bf16 in VMEM            -- gate-packed recurrent weights
    bhh_ref : (1, G) f32 in VMEM
    wfc_ref : (H, G) bf16 in VMEM            -- fc weight padded to 128 lanes
    bfc_ref : (1, G) f32 in VMEM
    out_ref : (B, G) f32 in VMEM             -- lane-dense output slab
    """
    whh = whh_ref[...]            # (H, G) bf16, loop-invariant
    bhh = bhh_ref[...]            # (1, G) f32
    # TODO(synk): hold whh resident in the MXU across the unrolled steps via
    # pltpu.matmul_push_rhs / matmul_acc_lhs / matmul_pop (review item 4);
    # kept as jnp.dot here for robustness/portability across v5e/v6e/v7x.

    h = jnp.zeros((B, H), jnp.float32)
    for t in range(T):                               # static, fully unrolled
        # In-kernel token -> projected-row gather (embedding & x@W_ih folded).
        gi = jnp.concatenate(
            [proj_ref[tok_ref[b, t]] for b in range(B)], axis=0)      # (B, G)
        gh = (jnp.dot(h.astype(jnp.bfloat16), whh,
                      preferred_element_type=jnp.float32) + bhh)      # (B, G)
        # Fused r/z sigmoid over the contiguous lane range [0, 2H).
        rz = jax.nn.sigmoid(gi[:, :2 * H] + gh[:, :2 * H])
        r = rz[:, :H]
        z = rz[:, H:2 * H]
        # PyTorch GRU: n = tanh(x@W_in + b_in + r * (h@W_hn + b_hn)).
        n = jnp.tanh(gi[:, 2 * H:3 * H] + r * gh[:, 2 * H:3 * H])
        h = n + z * (h - n)                          # == (1-z)*n + z*h

    # fc(out[:, -1, :]) -- lane-dense (B, 128) store, sliced in the wrapper.
    out_ref[...] = (jnp.dot(h.astype(jnp.bfloat16), wfc_ref[...],
                            preferred_element_type=jnp.float32)
                    + bfc_ref[...])


@jax.jit
def t_gru_forward(token_ids, emb_table, w_ih, w_hh, b_ih, b_hh, w_fc, b_fc):
    """token_ids: [B, T] int32. Returns logits [B, C]."""
    B, T = token_ids.shape
    H = w_hh.shape[-1]
    C = w_fc.shape[-1]
    G = 128  # fused gate width, padded from 3H=96 to a full 128-lane vreg
    assert 3 * H <= G and C <= G

    # --- one-time weight packing (XLA side, fused under jit) ------------------
    wih_cat = jnp.concatenate([w_ih[0], w_ih[1], w_ih[2]], axis=1)   # (E, 3H)
    whh_cat = jnp.concatenate([w_hh[0], w_hh[1], w_hh[2]], axis=1)   # (H, 3H)
    bih_cat = jnp.concatenate([b_ih[0], b_ih[1], b_ih[2]])           # (3H,)
    bhh_cat = jnp.concatenate([b_hh[0], b_hh[1], b_hh[2]])           # (3H,)
    pad = G - 3 * H

    # Embedding folded into the input projection: one row per vocab entry.
    # TODO(synk): the pretrained GloVe download itself has no Pallas analogue;
    # the table is built in-script and this fold is its amortized precompute.
    proj = (emb_table.astype(jnp.float32) @ wih_cat.astype(jnp.float32)
            + bih_cat[None, :].astype(jnp.float32))                  # (VOCAB, 3H)
    proj_pad = jnp.pad(proj, ((0, 0), (0, pad)))                     # (VOCAB, G)
    proj3d = proj_pad.reshape(proj_pad.shape[0], 1, G)               # (VOCAB,1,G)

    whh_pad = jnp.pad(whh_cat, ((0, 0), (0, pad))).astype(jnp.bfloat16)     # (H, G)
    bhh_pad = jnp.pad(bhh_cat, (0, pad)).reshape(1, G).astype(jnp.float32)  # (1, G)
    wfc_pad = jnp.pad(w_fc, ((0, 0), (0, G - C))).astype(jnp.bfloat16)      # (H, G)
    bfc_pad = jnp.pad(b_fc.reshape(1, C), ((0, 0), (0, G - C))
                      ).astype(jnp.float32)                                 # (1, G)

    kernel = functools.partial(gru_fc_kernel, T=T, B=B, H=H)
    vmem = pl.BlockSpec(memory_space=pltpu.MemorySpace.VMEM)
    smem = pl.BlockSpec(memory_space=pltpu.MemorySpace.SMEM)

    out_pad = pl.pallas_call(
        kernel,
        out_shape=jax.ShapeDtypeStruct((B, G), jnp.float32),
        in_specs=[smem, vmem, vmem, vmem, vmem, vmem],
        out_specs=vmem,
    )(token_ids.astype(jnp.int32), proj3d, whh_pad, bhh_pad, wfc_pad, bfc_pad)

    return out_pad[:, :C]


def t_gru_reference(token_ids, emb_table, w_ih, w_hh, b_ih, b_hh, w_fc, b_fc):
    """Pure-JAX reference matching torch.nn.GRU semantics."""
    x_emb = jnp.take(emb_table, token_ids, axis=0)  # [B, T, E]
    B = x_emb.shape[0]
    H = w_hh.shape[-1]
    h0 = jnp.zeros((B, H), jnp.float32)

    def step(h, x_t):
        r = jax.nn.sigmoid(x_t @ w_ih[0] + b_ih[0] + h @ w_hh[0] + b_hh[0])
        z = jax.nn.sigmoid(x_t @ w_ih[1] + b_ih[1] + h @ w_hh[1] + b_hh[1])
        n = jnp.tanh(x_t @ w_ih[2] + b_ih[2] + r * (h @ w_hh[2] + b_hh[2]))
        h_new = (1.0 - z) * n + z * h
        return h_new, None

    h_last, _ = lax.scan(step, h0, jnp.transpose(x_emb, (1, 0, 2)))
    return h_last @ w_fc + b_fc


if __name__ == "__main__":
    # Small, deterministic configuration consistent with the module:
    # GloVe 6B dim=200 embeddings -> input_size=200.
    VOCAB = 64
    EMB = 200          # input_size (GloVe dim)
    HIDDEN = 32        # hidden_size
    NUM_CLASSES = 4    # num_classes
    B, T = 2, 8        # batch, sequence length

    key = jax.random.PRNGKey(0)
    k_emb, k_wih, k_whh, k_bih, k_bhh, k_wfc, k_bfc, k_tok = jax.random.split(key, 8)

    scale = 1.0 / jnp.sqrt(HIDDEN)
    emb_table = jax.random.normal(k_emb, (VOCAB, EMB), jnp.float32) * 0.1
    w_ih = jax.random.uniform(k_wih, (3, EMB, HIDDEN), jnp.float32, -scale, scale)
    w_hh = jax.random.uniform(k_whh, (3, HIDDEN, HIDDEN), jnp.float32, -scale, scale)
    b_ih = jax.random.uniform(k_bih, (3, HIDDEN), jnp.float32, -scale, scale)
    b_hh = jax.random.uniform(k_bhh, (3, HIDDEN), jnp.float32, -scale, scale)
    w_fc = jax.random.uniform(k_wfc, (HIDDEN, NUM_CLASSES), jnp.float32, -scale, scale)
    b_fc = jax.random.uniform(k_bfc, (NUM_CLASSES,), jnp.float32, -scale, scale)

    token_ids = jax.random.randint(k_tok, (B, T), 0, VOCAB, dtype=jnp.int32)

    out = t_gru_forward(token_ids, emb_table, w_ih, w_hh, b_ih, b_hh, w_fc, b_fc)
    out = jax.block_until_ready(out)

    ref = t_gru_reference(token_ids, emb_table, w_ih, w_hh, b_ih, b_hh, w_fc, b_fc)
    assert out.shape == (B, NUM_CLASSES)
    # Tolerance loosened (bf16 matmul operands with f32 accumulation in-kernel).
    assert jnp.allclose(out, ref, atol=2e-2, rtol=2e-2), \
        "Pallas output mismatch vs JAX reference"

    print("KERNEL_OK")
</pallas_src>

<mosaic_0001>
module attributes {stable_mosaic.version = 11 : i64} {
  func.func @gru_fc_kernel(%arg0: memref<2x8xi32, #tpu.memory_space<smem>>, %arg1: memref<64x1x128xf32, #tpu.memory_space<vmem>>, %arg2: memref<32x128xbf16, #tpu.memory_space<vmem>>, %arg3: memref<1x128xf32, #tpu.memory_space<vmem>>, %arg4: memref<32x128xbf16, #tpu.memory_space<vmem>>, %arg5: memref<1x128xf32, #tpu.memory_space<vmem>>, %arg6: memref<2x128xf32, #tpu.memory_space<vmem>>) attributes {dimension_semantics = [], scalar_prefetch = 0 : i64, scratch_operands = 0 : i64, tpu.core_type = #tpu.core_type<tc>} {
    %c0 = arith.constant 0 : index
    %c0_0 = arith.constant 0 : index
    %0 = vector.load %arg2[%c0, %c0_0] : memref<32x128xbf16, #tpu.memory_space<vmem>>, vector<32x128xbf16>
    %c0_1 = arith.constant 0 : index
    %c0_2 = arith.constant 0 : index
    %1 = vector.load %arg3[%c0_1, %c0_2] : memref<1x128xf32, #tpu.memory_space<vmem>>, vector<1x128xf32>
    %cst = arith.constant 0.000000e+00 : f32
    %2 = vector.broadcast %cst : f32 to vector<2x32xf32>
    %c0_3 = arith.constant 0 : index
    %c0_4 = arith.constant 0 : index
    %3 = memref.load %arg0[%c0_3, %c0_4] : memref<2x8xi32, #tpu.memory_space<smem>>
    %4 = arith.index_cast %3 : i32 to index
    %c0_5 = arith.constant 0 : index
    %c0_6 = arith.constant 0 : index
    %5 = vector.load %arg1[%4, %c0_5, %c0_6] : memref<64x1x128xf32, #tpu.memory_space<vmem>>, vector<1x1x128xf32>
    %6 = vector.shape_cast %5 : vector<1x1x128xf32> to vector<1x128xf32>
    %c1 = arith.constant 1 : index
    %c0_7 = arith.constant 0 : index
    %7 = memref.load %arg0[%c1, %c0_7] : memref<2x8xi32, #tpu.memory_space<smem>>
    %8 = arith.index_cast %7 : i32 to index
    %c0_8 = arith.constant 0 : index
    %c0_9 = arith.constant 0 : index
    %9 = vector.load %arg1[%8, %c0_8, %c0_9] : memref<64x1x128xf32, #tpu.memory_space<vmem>>, vector<1x1x128xf32>
    %10 = vector.shape_cast %9 : vector<1x1x128xf32> to vector<1x128xf32>
    %11 = tpu.concatenate %6, %10 in 0 : vector<1x128xf32>, vector<1x128xf32> -> vector<2x128xf32>
    %12 = arith.truncf %2 : vector<2x32xf32> to vector<2x32xbf16>
    %cst_10 = arith.constant dense<0.000000e+00> : vector<2x128xf32>
    %13 = tpu.matmul %12, %0, %cst_10 {dimension_numbers = #tpu.dot_dimension_numbers<[1], [0], [0], [1], [0, 0, 1, 1], [], []>} : vector<2x32xbf16>, vector<32x128xbf16>, vector<2x128xf32> -> vector<2x128xf32>
    %14 = vector.broadcast %1 : vector<1x128xf32> to vector<2x128xf32>
    %15 = arith.addf %13, %14 : vector<2x128xf32>
    %16 = vector.extract_strided_slice %11 {offsets = [0, 0], sizes = [2, 64], strides = [1, 1]} : vector<2x128xf32> to vector<2x64xf32>
    %17 = vector.extract_strided_slice %15 {offsets = [0, 0], sizes = [2, 64], strides = [1, 1]} : vector<2x128xf32> to vector<2x64xf32>
    %18 = arith.addf %16, %17 : vector<2x64xf32>
    %19 = arith.negf %18 : vector<2x64xf32>
    %20 = math.exp %19 : vector<2x64xf32>
    %cst_11 = arith.constant 1.000000e+00 : f32
    %21 = vector.broadcast %cst_11 : f32 to vector<2x64xf32>
    %22 = arith.addf %21, %20 : vector<2x64xf32>
    %23 = arith.divf %21, %22 : vector<2x64xf32>
    %24 = vector.extract_strided_slice %23 {offsets = [0, 0], sizes = [2, 32], strides = [1, 1]} : vector<2x64xf32> to vector<2x32xf32>
    %25 = vector.extract_strided_slice %23 {offsets = [0, 32], sizes = [2, 32], strides = [1, 1]} : vector<2x64xf32> to vector<2x32xf32>
    %26 = vector.extract_strided_slice %11 {offsets = [0, 64], sizes = [2, 32], strides = [1, 1]} : vector<2x128xf32> to vector<2x32xf32>
    %27 = vector.extract_strided_slice %15 {offsets = [0, 64], sizes = [2, 32], strides = [1, 1]} : vector<2x128xf32> to vector<2x32xf32>
    %28 = arith.mulf %24, %27 : vector<2x32xf32>
    %29 = arith.addf %26, %28 : vector<2x32xf32>
    %30 = math.tanh %29 : vector<2x32xf32>
    %31 = arith.subf %2, %30 : vector<2x32xf32>
    %32 = arith.mulf %25, %31 : vector<2x32xf32>
    %33 = arith.addf %30, %32 : vector<2x32xf32>
    %c0_12 = arith.constant 0 : index
    %c1_13 = arith.constant 1 : index
    %34 = memref.load %arg0[%c0_12, %c1_13] : memref<2x8xi32, #tpu.memory_space<smem>>
    %35 = arith.index_cast %34 : i32 to index
    %c0_14 = arith.constant 0 : index
    %c0_15 = arith.constant 0 : index
    %36 = vector.load %arg1[%35, %c0_14, %c0_15] : memref<64x1x128xf32, #tpu.memory_space<vmem>>, vector<1x1x128xf32>
    %37 = vector.shape_cast %36 : vector<1x1x128xf32> to vector<1x128xf32>
    %c1_16 = arith.constant 1 : index
    %c1_17 = arith.constant 1 : index
    %38 = memref.load %arg0[%c1_16, %c1_17] : memref<2x8xi32, #tpu.memory_space<smem>>
    %39 = arith.index_cast %38 : i32 to index
    %c0_18 = arith.constant 0 : index
    %c0_19 = arith.constant 0 : index
    %40 = vector.load %arg1[%39, %c0_18, %c0_19] : memref<64x1x128xf32, #tpu.memory_space<vmem>>, vector<1x1x128xf32>
    %41 = vector.shape_cast %40 : vector<1x1x128xf32> to vector<1x128xf32>
    %42 = tpu.concatenate %37, %41 in 0 : vector<1x128xf32>, vector<1x128xf32> -> vector<2x128xf32>
    %43 = arith.truncf %33 : vector<2x32xf32> to vector<2x32xbf16>
    %cst_20 = arith.constant dense<0.000000e+00> : vector<2x128xf32>
    %44 = tpu.matmul %43, %0, %cst_20 {dimension_numbers = #tpu.dot_dimension_numbers<[1], [0], [0], [1], [0, 0, 1, 1], [], []>} : vector<2x32xbf16>, vector<32x128xbf16>, vector<2x128xf32> -> vector<2x128xf32>
    %45 = vector.broadcast %1 : vector<1x128xf32> to vector<2x128xf32>
    %46 = arith.addf %44, %45 : vector<2x128xf32>
    %47 = vector.extract_strided_slice %42 {offsets = [0, 0], sizes = [2, 64], strides = [1, 1]} : vector<2x128xf32> to vector<2x64xf32>
    %48 = vector.extract_strided_slice %46 {offsets = [0, 0], sizes = [2, 64], strides = [1, 1]} : vector<2x128xf32> to vector<2x64xf32>
    %49 = arith.addf %47, %48 : vector<2x64xf32>
    %50 = arith.negf %49 : vector<2x64xf32>
    %51 = math.exp %50 : vector<2x64xf32>
    %cst_21 = arith.constant 1.000000e+00 : f32
    %52 = vector.broadcast %cst_21 : f32 to vector<2x64xf32>
    %53 = arith.addf %52, %51 : vector<2x64xf32>
    %54 = arith.divf %52, %53 : vector<2x64xf32>
    %55 = vector.extract_strided_slice %54 {offsets = [0, 0], sizes = [2, 32], strides = [1, 1]} : vector<2x64xf32> to vector<2x32xf32>
    %56 = vector.extract_strided_slice %54 {offsets = [0, 32], sizes = [2, 32], strides = [1, 1]} : vector<2x64xf32> to vector<2x32xf32>
    %57 = vector.extract_strided_slice %42 {offsets = [0, 64], sizes = [2, 32], strides = [1, 1]} : vector<2x128xf32> to vector<2x32xf32>
    %58 = vector.extract_strided_slice %46 {offsets = [0, 64], sizes = [2, 32], strides = [1, 1]} : vector<2x128xf32> to vector<2x32xf32>
    %59 = arith.mulf %55, %58 : vector<2x32xf32>
    %60 = arith.addf %57, %59 : vector<2x32xf32>
    %61 = math.tanh %60 : vector<2x32xf32>
    %62 = arith.subf %33, %61 : vector<2x32xf32>
    %63 = arith.mulf %56, %62 : vector<2x32xf32>
    %64 = arith.addf %61, %63 : vector<2x32xf32>
    %c0_22 = arith.constant 0 : index
    %c2 = arith.constant 2 : index
    %65 = memref.load %arg0[%c0_22, %c2] : memref<2x8xi32, #tpu.memory_space<smem>>
    %66 = arith.index_cast %65 : i32 to index
    %c0_23 = arith.constant 0 : index
    %c0_24 = arith.constant 0 : index
    %67 = vector.load %arg1[%66, %c0_23, %c0_24] : memref<64x1x128xf32, #tpu.memory_space<vmem>>, vector<1x1x128xf32>
    %68 = vector.shape_cast %67 : vector<1x1x128xf32> to vector<1x128xf32>
    %c1_25 = arith.constant 1 : index
    %c2_26 = arith.constant 2 : index
    %69 = memref.load %arg0[%c1_25, %c2_26] : memref<2x8xi32, #tpu.memory_space<smem>>
    %70 = arith.index_cast %69 : i32 to index
    %c0_27 = arith.constant 0 : index
    %c0_28 = arith.constant 0 : index
    %71 = vector.load %arg1[%70, %c0_27, %c0_28] : memref<64x1x128xf32, #tpu.memory_space<vmem>>, vector<1x1x128xf32>
    %72 = vector.shape_cast %71 : vector<1x1x128xf32> to vector<1x128xf32>
    %73 = tpu.concatenate %68, %72 in 0 : vector<1x128xf32>, vector<1x128xf32> -> vector<2x128xf32>
    %74 = arith.truncf %64 : vector<2x32xf32> to vector<2x32xbf16>
    %cst_29 = arith.constant dense<0.000000e+00> : vector<2x128xf32>
    %75 = tpu.matmul %74, %0, %cst_29 {dimension_numbers = #tpu.dot_dimension_numbers<[1], [0], [0], [1], [0, 0, 1, 1], [], []>} : vector<2x32xbf16>, vector<32x128xbf16>, vector<2x128xf32> -> vector<2x128xf32>
    %76 = vector.broadcast %1 : vector<1x128xf32> to vector<2x128xf32>
    %77 = arith.addf %75, %76 : vector<2x128xf32>
    %78 = vector.extract_strided_slice %73 {offsets = [0, 0], sizes = [2, 64], strides = [1, 1]} : vector<2x128xf32> to vector<2x64xf32>
    %79 = vector.extract_strided_slice %77 {offsets = [0, 0], sizes = [2, 64], strides = [1, 1]} : vector<2x128xf32> to vector<2x64xf32>
    %80 = arith.addf %78, %79 : vector<2x64xf32>
    %81 = arith.negf %80 : vector<2x64xf32>
    %82 = math.exp %81 : vector<2x64xf32>
    %cst_30 = arith.constant 1.000000e+00 : f32
    %83 = vector.broadcast %cst_30 : f32 to vector<2x64xf32>
    %84 = arith.addf %83, %82 : vector<2x64xf32>
    %85 = arith.divf %83, %84 : vector<2x64xf32>
    %86 = vector.extract_strided_slice %85 {offsets = [0, 0], sizes = [2, 32], strides = [1, 1]} : vector<2x64xf32> to vector<2x32xf32>
    %87 = vector.extract_strided_slice %85 {offsets = [0, 32], sizes = [2, 32], strides = [1, 1]} : vector<2x64xf32> to vector<2x32xf32>
    %88 = vector.extract_strided_slice %73 {offsets = [0, 64], sizes = [2, 32], strides = [1, 1]} : vector<2x128xf32> to vector<2x32xf32>
    %89 = vector.extract_strided_slice %77 {offsets = [0, 64], sizes = [2, 32], strides = [1, 1]} : vector<2x128xf32> to vector<2x32xf32>
    %90 = arith.mulf %86, %89 : vector<2x32xf32>
    %91 = arith.addf %88, %90 : vector<2x32xf32>
    %92 = math.tanh %91 : vector<2x32xf32>
    %93 = arith.subf %64, %92 : vector<2x32xf32>
    %94 = arith.mulf %87, %93 : vector<2x32xf32>
    %95 = arith.addf %92, %94 : vector<2x32xf32>
    %c0_31 = arith.constant 0 : index
    %c3 = arith.constant 3 : index
    %96 = memref.load %arg0[%c0_31, %c3] : memref<2x8xi32, #tpu.memory_space<smem>>
    %97 = arith.index_cast %96 : i32 to index
    %c0_32 = arith.constant 0 : index
    %c0_33 = arith.constant 0 : index
    %98 = vector.load %arg1[%97, %c0_32, %c0_33] : memref<64x1x128xf32, #tpu.memory_space<vmem>>, vector<1x1x128xf32>
    %99 = vector.shape_cast %98 : vector<1x1x128xf32> to vector<1x128xf32>
    %c1_34 = arith.constant 1 : index
    %c3_35 = arith.constant 3 : index
    %100 = memref.load %arg0[%c1_34, %c3_35] : memref<2x8xi32, #tpu.memory_space<smem>>
    %101 = arith.index_cast %100 : i32 to index
    %c0_36 = arith.constant 0 : index
    %c0_37 = arith.constant 0 : index
    %102 = vector.load %arg1[%101, %c0_36, %c0_37] : memref<64x1x128xf32, #tpu.memory_space<vmem>>, vector<1x1x128xf32>
    %103 = vector.shape_cast %102 : vector<1x1x128xf32> to vector<1x128xf32>
    %104 = tpu.concatenate %99, %103 in 0 : vector<1x128xf32>, vector<1x128xf32> -> vector<2x128xf32>
    %105 = arith.truncf %95 : vector<2x32xf32> to vector<2x32xbf16>
    %cst_38 = arith.constant dense<0.000000e+00> : vector<2x128xf32>
    %106 = tpu.matmul %105, %0, %cst_38 {dimension_numbers = #tpu.dot_dimension_numbers<[1], [0], [0], [1], [0, 0, 1, 1], [], []>} : vector<2x32xbf16>, vector<32x128xbf16>, vector<2x128xf32> -> vector<2x128xf32>
    %107 = vector.broadcast %1 : vector<1x128xf32> to vector<2x128xf32>
    %108 = arith.addf %106, %107 : vector<2x128xf32>
    %109 = vector.extract_strided_slice %104 {offsets = [0, 0], sizes = [2, 64], strides = [1, 1]} : vector<2x128xf32> to vector<2x64xf32>
    %110 = vector.extract_strided_slice %108 {offsets = [0, 0], sizes = [2, 64], strides = [1, 1]} : vector<2x128xf32> to vector<2x64xf32>
    %111 = arith.addf %109, %110 : vector<2x64xf32>
    %112 = arith.negf %111 : vector<2x64xf32>
    %113 = math.exp %112 : vector<2x64xf32>
    %cst_39 = arith.constant 1.000000e+00 : f32
    %114 = vector.broadcast %cst_39 : f32 to vector<2x64xf32>
    %115 = arith.addf %114, %113 : vector<2x64xf32>
    %116 = arith.divf %114, %115 : vector<2x64xf32>
    %117 = vector.extract_strided_slice %116 {offsets = [0, 0], sizes = [2, 32], strides = [1, 1]} : vector<2x64xf32> to vector<2x32xf32>
    %118 = vector.extract_strided_slice %116 {offsets = [0, 32], sizes = [2, 32], strides = [1, 1]} : vector<2x64xf32> to vector<2x32xf32>
    %119 = vector.extract_strided_slice %104 {offsets = [0, 64], sizes = [2, 32], strides = [1, 1]} : vector<2x128xf32> to vector<2x32xf32>
    %120 = vector.extract_strided_slice %108 {offsets = [0, 64], sizes = [2, 32], strides = [1, 1]} : vector<2x128xf32> to vector<2x32xf32>
    %121 = arith.mulf %117, %120 : vector<2x32xf32>
    %122 = arith.addf %119, %121 : vector<2x32xf32>
    %123 = math.tanh %122 : vector<2x32xf32>
    %124 = arith.subf %95, %123 : vector<2x32xf32>
    %125 = arith.mulf %118, %124 : vector<2x32xf32>
    %126 = arith.addf %123, %125 : vector<2x32xf32>
    %c0_40 = arith.constant 0 : index
    %c4 = arith.constant 4 : index
    %127 = memref.load %arg0[%c0_40, %c4] : memref<2x8xi32, #tpu.memory_space<smem>>
    %128 = arith.index_cast %127 : i32 to index
    %c0_41 = arith.constant 0 : index
    %c0_42 = arith.constant 0 : index
    %129 = vector.load %arg1[%128, %c0_41, %c0_42] : memref<64x1x128xf32, #tpu.memory_space<vmem>>, vector<1x1x128xf32>
    %130 = vector.shape_cast %129 : vector<1x1x128xf32> to vector<1x128xf32>
    %c1_43 = arith.constant 1 : index
    %c4_44 = arith.constant 4 : index
    %131 = memref.load %arg0[%c1_43, %c4_44] : memref<2x8xi32, #tpu.memory_space<smem>>
    %132 = arith.index_cast %131 : i32 to index
    %c0_45 = arith.constant 0 : index
    %c0_46 = arith.constant 0 : index
    %133 = vector.load %arg1[%132, %c0_45, %c0_46] : memref<64x1x128xf32, #tpu.memory_space<vmem>>, vector<1x1x128xf32>
    %134 = vector.shape_cast %133 : vector<1x1x128xf32> to vector<1x128xf32>
    %135 = tpu.concatenate %130, %134 in 0 : vector<1x128xf32>, vector<1x128xf32> -> vector<2x128xf32>
    %136 = arith.truncf %126 : vector<2x32xf32> to vector<2x32xbf16>
    %cst_47 = arith.constant dense<0.000000e+00> : vector<2x128xf32>
    %137 = tpu.matmul %136, %0, %cst_47 {dimension_numbers = #tpu.dot_dimension_numbers<[1], [0], [0], [1], [0, 0, 1, 1], [], []>} : vector<2x32xbf16>, vector<32x128xbf16>, vector<2x128xf32> -> vector<2x128xf32>
    %138 = vector.broadcast %1 : vector<1x128xf32> to vector<2x128xf32>
    %139 = arith.addf %137, %138 : vector<2x128xf32>
    %140 = vector.extract_strided_slice %135 {offsets = [0, 0], sizes = [2, 64], strides = [1, 1]} : vector<2x128xf32> to vector<2x64xf32>
    %141 = vector.extract_strided_slice %139 {offsets = [0, 0], sizes = [2, 64], strides = [1, 1]} : vector<2x128xf32> to vector<2x64xf32>
    %142 = arith.addf %140, %141 : vector<2x64xf32>
    %143 = arith.negf %142 : vector<2x64xf32>
    %144 = math.exp %143 : vector<2x64xf32>
    %cst_48 = arith.constant 1.000000e+00 : f32
    %145 = vector.broadcast %cst_48 : f32 to vector<2x64xf32>
    %146 = arith.addf %145, %144 : vector<2x64xf32>
    %147 = arith.divf %145, %146 : vector<2x64xf32>
    %148 = vector.extract_strided_slice %147 {offsets = [0, 0], sizes = [2, 32], strides = [1, 1]} : vector<2x64xf32> to vector<2x32xf32>
    %149 = vector.extract_strided_slice %147 {offsets = [0, 32], sizes = [2, 32], strides = [1, 1]} : vector<2x64xf32> to vector<2x32xf32>
    %150 = vector.extract_strided_slice %135 {offsets = [0, 64], sizes = [2, 32], strides = [1, 1]} : vector<2x128xf32> to vector<2x32xf32>
    %151 = vector.extract_strided_slice %139 {offsets = [0, 64], sizes = [2, 32], strides = [1, 1]} : vector<2x128xf32> to vector<2x32xf32>
    %152 = arith.mulf %148, %151 : vector<2x32xf32>
    %153 = arith.addf %150, %152 : vector<2x32xf32>
    %154 = math.tanh %153 : vector<2x32xf32>
    %155 = arith.subf %126, %154 : vector<2x32xf32>
    %156 = arith.mulf %149, %155 : vector<2x32xf32>
    %157 = arith.addf %154, %156 : vector<2x32xf32>
    %c0_49 = arith.constant 0 : index
    %c5 = arith.constant 5 : index
    %158 = memref.load %arg0[%c0_49, %c5] : memref<2x8xi32, #tpu.memory_space<smem>>
    %159 = arith.index_cast %158 : i32 to index
    %c0_50 = arith.constant 0 : index
    %c0_51 = arith.constant 0 : index
    %160 = vector.load %arg1[%159, %c0_50, %c0_51] : memref<64x1x128xf32, #tpu.memory_space<vmem>>, vector<1x1x128xf32>
    %161 = vector.shape_cast %160 : vector<1x1x128xf32> to vector<1x128xf32>
    %c1_52 = arith.constant 1 : index
    %c5_53 = arith.constant 5 : index
    %162 = memref.load %arg0[%c1_52, %c5_53] : memref<2x8xi32, #tpu.memory_space<smem>>
    %163 = arith.index_cast %162 : i32 to index
    %c0_54 = arith.constant 0 : index
    %c0_55 = arith.constant 0 : index
    %164 = vector.load %arg1[%163, %c0_54, %c0_55] : memref<64x1x128xf32, #tpu.memory_space<vmem>>, vector<1x1x128xf32>
    %165 = vector.shape_cast %164 : vector<1x1x128xf32> to vector<1x128xf32>
    %166 = tpu.concatenate %161, %165 in 0 : vector<1x128xf32>, vector<1x128xf32> -> vector<2x128xf32>
    %167 = arith.truncf %157 : vector<2x32xf32> to vector<2x32xbf16>
    %cst_56 = arith.constant dense<0.000000e+00> : vector<2x128xf32>
    %168 = tpu.matmul %167, %0, %cst_56 {dimension_numbers = #tpu.dot_dimension_numbers<[1], [0], [0], [1], [0, 0, 1, 1], [], []>} : vector<2x32xbf16>, vector<32x128xbf16>, vector<2x128xf32> -> vector<2x128xf32>
    %169 = vector.broadcast %1 : vector<1x128xf32> to vector<2x128xf32>
    %170 = arith.addf %168, %169 : vector<2x128xf32>
    %171 = vector.extract_strided_slice %166 {offsets = [0, 0], sizes = [2, 64], strides = [1, 1]} : vector<2x128xf32> to vector<2x64xf32>
    %172 = vector.extract_strided_slice %170 {offsets = [0, 0], sizes = [2, 64], strides = [1, 1]} : vector<2x128xf32> to vector<2x64xf32>
    %173 = arith.addf %171, %172 : vector<2x64xf32>
    %174 = arith.negf %173 : vector<2x64xf32>
    %175 = math.exp %174 : vector<2x64xf32>
    %cst_57 = arith.constant 1.000000e+00 : f32
    %176 = vector.broadcast %cst_57 : f32 to vector<2x64xf32>
    %177 = arith.addf %176, %175 : vector<2x64xf32>
    %178 = arith.divf %176, %177 : vector<2x64xf32>
    %179 = vector.extract_strided_slice %178 {offsets = [0, 0], sizes = [2, 32], strides = [1, 1]} : vector<2x64xf32> to vector<2x32xf32>
    %180 = vector.extract_strided_slice %178 {offsets = [0, 32], sizes = [2, 32], strides = [1, 1]} : vector<2x64xf32> to vector<2x32xf32>
    %181 = vector.extract_strided_slice %166 {offsets = [0, 64], sizes = [2, 32], strides = [1, 1]} : vector<2x128xf32> to vector<2x32xf32>
    %182 = vector.extract_strided_slice %170 {offsets = [0, 64], sizes = [2, 32], strides = [1, 1]} : vector<2x128xf32> to vector<2x32xf32>
    %183 = arith.mulf %179, %182 : vector<2x32xf32>
    %184 = arith.addf %181, %183 : vector<2x32xf32>
    %185 = math.tanh %184 : vector<2x32xf32>
    %186 = arith.subf %157, %185 : vector<2x32xf32>
    %187 = arith.mulf %180, %186 : vector<2x32xf32>
    %188 = arith.addf %185, %187 : vector<2x32xf32>
    %c0_58 = arith.constant 0 : index
    %c6 = arith.constant 6 : index
    %189 = memref.load %arg0[%c0_58, %c6] : memref<2x8xi32, #tpu.memory_space<smem>>
    %190 = arith.index_cast %189 : i32 to index
    %c0_59 = arith.constant 0 : index
    %c0_60 = arith.constant 0 : index
    %191 = vector.load %arg1[%190, %c0_59, %c0_60] : memref<64x1x128xf32, #tpu.memory_space<vmem>>, vector<1x1x128xf32>
    %192 = vector.shape_cast %191 : vector<1x1x128xf32> to vector<1x128xf32>
    %c1_61 = arith.constant 1 : index
    %c6_62 = arith.constant 6 : index
    %193 = memref.load %arg0[%c1_61, %c6_62] : memref<2x8xi32, #tpu.memory_space<smem>>
    %194 = arith.index_cast %193 : i32 to index
    %c0_63 = arith.constant 0 : index
    %c0_64 = arith.constant 0 : index
    %195 = vector.load %arg1[%194, %c0_63, %c0_64] : memref<64x1x128xf32, #tpu.memory_space<vmem>>, vector<1x1x128xf32>
    %196 = vector.shape_cast %195 : vector<1x1x128xf32> to vector<1x128xf32>
    %197 = tpu.concatenate %192, %196 in 0 : vector<1x128xf32>, vector<1x128xf32> -> vector<2x128xf32>
    %198 = arith.truncf %188 : vector<2x32xf32> to vector<2x32xbf16>
    %cst_65 = arith.constant dense<0.000000e+00> : vector<2x128xf32>
    %199 = tpu.matmul %198, %0, %cst_65 {dimension_numbers = #tpu.dot_dimension_numbers<[1], [0], [0], [1], [0, 0, 1, 1], [], []>} : vector<2x32xbf16>, vector<32x128xbf16>, vector<2x128xf32> -> vector<2x128xf32>
    %200 = vector.broadcast %1 : vector<1x128xf32> to vector<2x128xf32>
    %201 = arith.addf %199, %200 : vector<2x128xf32>
    %202 = vector.extract_strided_slice %197 {offsets = [0, 0], sizes = [2, 64], strides = [1, 1]} : vector<2x128xf32> to vector<2x64xf32>
    %203 = vector.extract_strided_slice %201 {offsets = [0, 0], sizes = [2, 64], strides = [1, 1]} : vector<2x128xf32> to vector<2x64xf32>
    %204 = arith.addf %202, %203 : vector<2x64xf32>
    %205 = arith.negf %204 : vector<2x64xf32>
    %206 = math.exp %205 : vector<2x64xf32>
    %cst_66 = arith.constant 1.000000e+00 : f32
    %207 = vector.broadcast %cst_66 : f32 to vector<2x64xf32>
    %208 = arith.addf %207, %206 : vector<2x64xf32>
    %209 = arith.divf %207, %208 : vector<2x64xf32>
    %210 = vector.extract_strided_slice %209 {offsets = [0, 0], sizes = [2, 32], strides = [1, 1]} : vector<2x64xf32> to vector<2x32xf32>
    %211 = vector.extract_strided_slice %209 {offsets = [0, 32], sizes = [2, 32], strides = [1, 1]} : vector<2x64xf32> to vector<2x32xf32>
    %212 = vector.extract_strided_slice %197 {offsets = [0, 64], sizes = [2, 32], strides = [1, 1]} : vector<2x128xf32> to vector<2x32xf32>
    %213 = vector.extract_strided_slice %201 {offsets = [0, 64], sizes = [2, 32], strides = [1, 1]} : vector<2x128xf32> to vector<2x32xf32>
    %214 = arith.mulf %210, %213 : vector<2x32xf32>
    %215 = arith.addf %212, %214 : vector<2x32xf32>
    %216 = math.tanh %215 : vector<2x32xf32>
    %217 = arith.subf %188, %216 : vector<2x32xf32>
    %218 = arith.mulf %211, %217 : vector<2x32xf32>
    %219 = arith.addf %216, %218 : vector<2x32xf32>
    %c0_67 = arith.constant 0 : index
    %c7 = arith.constant 7 : index
    %220 = memref.load %arg0[%c0_67, %c7] : memref<2x8xi32, #tpu.memory_space<smem>>
    %221 = arith.index_cast %220 : i32 to index
    %c0_68 = arith.constant 0 : index
    %c0_69 = arith.constant 0 : index
    %222 = vector.load %arg1[%221, %c0_68, %c0_69] : memref<64x1x128xf32, #tpu.memory_space<vmem>>, vector<1x1x128xf32>
    %223 = vector.shape_cast %222 : vector<1x1x128xf32> to vector<1x128xf32>
    %c1_70 = arith.constant 1 : index
    %c7_71 = arith.constant 7 : index
    %224 = memref.load %arg0[%c1_70, %c7_71] : memref<2x8xi32, #tpu.memory_space<smem>>
    %225 = arith.index_cast %224 : i32 to index
    %c0_72 = arith.constant 0 : index
    %c0_73 = arith.constant 0 : index
    %226 = vector.load %arg1[%225, %c0_72, %c0_73] : memref<64x1x128xf32, #tpu.memory_space<vmem>>, vector<1x1x128xf32>
    %227 = vector.shape_cast %226 : vector<1x1x128xf32> to vector<1x128xf32>
    %228 = tpu.concatenate %223, %227 in 0 : vector<1x128xf32>, vector<1x128xf32> -> vector<2x128xf32>
    %229 = arith.truncf %219 : vector<2x32xf32> to vector<2x32xbf16>
    %cst_74 = arith.constant dense<0.000000e+00> : vector<2x128xf32>
    %230 = tpu.matmul %229, %0, %cst_74 {dimension_numbers = #tpu.dot_dimension_numbers<[1], [0], [0], [1], [0, 0, 1, 1], [], []>} : vector<2x32xbf16>, vector<32x128xbf16>, vector<2x128xf32> -> vector<2x128xf32>
    %231 = vector.broadcast %1 : vector<1x128xf32> to vector<2x128xf32>
    %232 = arith.addf %230, %231 : vector<2x128xf32>
    %233 = vector.extract_strided_slice %228 {offsets = [0, 0], sizes = [2, 64], strides = [1, 1]} : vector<2x128xf32> to vector<2x64xf32>
    %234 = vector.extract_strided_slice %232 {offsets = [0, 0], sizes = [2, 64], strides = [1, 1]} : vector<2x128xf32> to vector<2x64xf32>
    %235 = arith.addf %233, %234 : vector<2x64xf32>
    %236 = arith.negf %235 : vector<2x64xf32>
    %237 = math.exp %236 : vector<2x64xf32>
    %cst_75 = arith.constant 1.000000e+00 : f32
    %238 = vector.broadcast %cst_75 : f32 to vector<2x64xf32>
    %239 = arith.addf %238, %237 : vector<2x64xf32>
    %240 = arith.divf %238, %239 : vector<2x64xf32>
    %241 = vector.extract_strided_slice %240 {offsets = [0, 0], sizes = [2, 32], strides = [1, 1]} : vector<2x64xf32> to vector<2x32xf32>
    %242 = vector.extract_strided_slice %240 {offsets = [0, 32], sizes = [2, 32], strides = [1, 1]} : vector<2x64xf32> to vector<2x32xf32>
    %243 = vector.extract_strided_slice %228 {offsets = [0, 64], sizes = [2, 32], strides = [1, 1]} : vector<2x128xf32> to vector<2x32xf32>
    %244 = vector.extract_strided_slice %232 {offsets = [0, 64], sizes = [2, 32], strides = [1, 1]} : vector<2x128xf32> to vector<2x32xf32>
    %245 = arith.mulf %241, %244 : vector<2x32xf32>
    %246 = arith.addf %243, %245 : vector<2x32xf32>
    %247 = math.tanh %246 : vector<2x32xf32>
    %248 = arith.subf %219, %247 : vector<2x32xf32>
    %249 = arith.mulf %242, %248 : vector<2x32xf32>
    %250 = arith.addf %247, %249 : vector<2x32xf32>
    %251 = arith.truncf %250 : vector<2x32xf32> to vector<2x32xbf16>
    %c0_76 = arith.constant 0 : index
    %c0_77 = arith.constant 0 : index
    %252 = vector.load %arg4[%c0_76, %c0_77] : memref<32x128xbf16, #tpu.memory_space<vmem>>, vector<32x128xbf16>
    %cst_78 = arith.constant dense<0.000000e+00> : vector<2x128xf32>
    %253 = tpu.matmul %251, %252, %cst_78 {dimension_numbers = #tpu.dot_dimension_numbers<[1], [0], [0], [1], [0, 0, 1, 1], [], []>} : vector<2x32xbf16>, vector<32x128xbf16>, vector<2x128xf32> -> vector<2x128xf32>
    %c0_79 = arith.constant 0 : index
    %c0_80 = arith.constant 0 : index
    %254 = vector.load %arg5[%c0_79, %c0_80] : memref<1x128xf32, #tpu.memory_space<vmem>>, vector<1x128xf32>
    %255 = vector.broadcast %254 : vector<1x128xf32> to vector<2x128xf32>
    %256 = arith.addf %253, %255 : vector<2x128xf32>
    %c0_81 = arith.constant 0 : index
    %c0_82 = arith.constant 0 : index
    %257 = vector.load %arg6[%c0_81, %c0_82] : memref<2x128xf32, #tpu.memory_space<vmem>>, vector<2x128xf32>
    tpu.vector_store %arg6[%c0_81, %c0_82], %256 {strides = array<i32>} : memref<2x128xf32, #tpu.memory_space<vmem>>, vector<2x128xf32>,
    return
  }
}

</mosaic_0001>

<llo_original>
// kernel: t_gru_forward.1
$region0: #{t_gru_forward.1}
  #allocation0 [shape = 'u32[]', space=smem, size = 0x4, offset = 0x4, fixed_abs, tag = 'smem constant byte address 0x4 - core index']
  #allocation1 [shape = 'u32[144,128]{1,0:T(1,128)}', space=vmem, size = 0x12000, scoped, tag = 'internal scratch']
  %s0 = inlined_call_operand.vmem [shape: s32[2,8], index: 0, kind: input, shape index: {}]
  %s1 = inlined_call_operand.vmem [shape: f32[64,1,128], index: 1, kind: input, shape index: {}]
  %s2 = inlined_call_operand.vmem [shape: bf16[32,128], index: 2, kind: input, shape index: {}]
  %s3 = inlined_call_operand.vmem [shape: f32[1,128], index: 3, kind: input, shape index: {}]
  %s4 = inlined_call_operand.vmem [shape: bf16[32,128], index: 4, kind: input, shape index: {}]
  %s5 = inlined_call_operand.vmem [shape: f32[1,128], index: 5, kind: input, shape index: {}]
  %s6 = inlined_call_operand.hbm [shape: f32[2,128], index: 6, kind: output, shape index: {}]
  %s7 = sld [smem:[#allocation0]]
  $region38: #{t_gru_forward.1} parent=0
    _
  %s9 = ssub.s32 1, %s7
  %s10 = scalar_select 0, %s9, %s7
  $region1: #{t_gru_forward.1} parent=0
    #allocation2 [shape = 'u8[1024]{0}', space=smem, size = 0x400, scoped, tag = 'input window, operand 0, single buffered']
    #allocation3 [shape = 's32[1]{0}', space=sflag, size = 0x4, scoped, tag = 'scoped memory for t_gru_forward.1']
    #allocation4 [shape = 's32[1]{0}', space=sflag, size = 0x4, scoped, tag = 'scoped memory for t_gru_forward.1']
    #allocation5 [shape = 'u8[1024]{0}', space=vmem, size = 0x400, scoped, tag = 'output window, operand 0, single buffered']
    %11 = vsyncpa [#allocation4], 0
    %12 = vsyncpa [#allocation3], 0
    // Predicated region
    $region2: #{t_gru_forward.1} parent=1 // pred_check
      _
    $region3: #{t_gru_forward.1} parent=1 // pred_check_branch
      %14 = sbr.rel (0) target = $region5
    $region4: #{t_gru_forward.1} parent=1 // pred_region
      %s16 = ssub.s32 32, 32
      %17 = vsyncadd [#allocation4], %s16
      %s19 = sshll.u32 %s0, 4
      %s20 = int_to_ptr.vmem [resolvable:$true] %s19
      %22 = dma.vmem_to_smem %s20, 32, [#allocation2], [#allocation4]
    $region5: #{t_gru_forward.1} parent=1 // pred_fallthru
      _
    // Predicated region
    $region6: #{t_gru_forward.1} parent=1 // pred_check
      _
    $region7: #{t_gru_forward.1} parent=1 // pred_check_branch
      %24 = sbr.rel (0) target = $region9
    $region8: #{t_gru_forward.1} parent=1 // pred_region
      _
    $region9: #{t_gru_forward.1} parent=1 // pred_fallthru
      _
    // Predicated region
    $region10: #{t_gru_forward.1} parent=1 // pred_check
      _
    $region11: #{t_gru_forward.1} parent=1 // pred_check_branch
      %26 = sbr.rel (0) target = $region13
    $region12: #{t_gru_forward.1} parent=1 // pred_region
      _
    $region13: #{t_gru_forward.1} parent=1 // pred_fallthru
      _
    // Predicated region
    $region14: #{t_gru_forward.1} parent=1 // pred_check
      _
    $region15: #{t_gru_forward.1} parent=1 // pred_check_branch
      %28 = sbr.rel (0) target = $region17
    $region16: #{t_gru_forward.1} parent=1 // pred_region
      _
    $region17: #{t_gru_forward.1} parent=1 // pred_fallthru
      _
    // Predicated region
    $region18: #{t_gru_forward.1} parent=1 // pred_check
      _
    $region19: #{t_gru_forward.1} parent=1 // pred_check_branch
      %30 = sbr.rel (0) target = $region21
    $region20: #{t_gru_forward.1} parent=1 // pred_region
      _
    $region21: #{t_gru_forward.1} parent=1 // pred_fallthru
      _
    // Predicated region
    $region22: #{t_gru_forward.1} parent=1 // pred_check
      _
    $region23: #{t_gru_forward.1} parent=1 // pred_check_branch
      %32 = sbr.rel (0) target = $region25
    $region24: #{t_gru_forward.1} parent=1 // pred_region
      _
    $region25: #{t_gru_forward.1} parent=1 // pred_fallthru
      _
    // Predicated region
    $region26: #{t_gru_forward.1} parent=1 // pred_check
      _
    $region27: #{t_gru_forward.1} parent=1 // pred_check_branch
      %34 = sbr.rel (0) target = $region29
    $region28: #{t_gru_forward.1} parent=1 // pred_region
      %35 = dma.done [#allocation4], 32
    $region29: #{t_gru_forward.1} parent=1 // pred_fallthru
      _
    %36 = sfence
    %v38 = vld [vmem:[%s2] sm:$0xf]
    %v39 = vld [vmem:[%s2 + $0x4] sm:$0xf]
    %v40 = vld [vmem:[%s2 + $0x8] sm:$0xf]
    %v41 = vld [vmem:[%s2 + $0xc] sm:$0xf]
    %v42 = vld [vmem:[%s3] sm:$0x1]
    %s43 = sld [smem:[#allocation2]]
    %s44 = scalar_lea.vmem %s1, %s43
    %v45 = vld [vmem:[%s44] sm:$0x1]
    %s46 = sld [smem:[#allocation2 + $0x80]]
    %s47 = scalar_lea.vmem %s1, %s46
    %v48 = vld [vmem:[%s47] sm:$0x1]
    %v50 = vlaneseq
    %v51 = vshrl.u32 %v50, 7
    %v52 = vsub.s32 0, %v51
    %v53 = vrot.slane %v48, %v52
    %vm55 = vcmask 1040384
    %v56 = vsel %vm55, %v45, %v53
    %v58 = vlaneseq
    %v59 = vshrl.u32 %v58, 7
    %v60 = vsub.s32 0, %v59
    %v61 = vrot.slane %v42, %v60
    %v67 = vunpack.c.l.b16 %v38
    %v68 = vunpack.c.l.b16 %v39
    %v69 = vunpack.c.l.b16 %v40
    %v70 = vunpack.c.l.b16 %v41
    %v71 = vpack.c.b16 %v68, %v67
    %v72 = vpack.c.b16 %v70, %v69
    %vm75 = vcmask 261120
    %v77 = vsel %vm75, 0, 0
    %79 = vmatprep.subr.bf16.mxu0 0
    %80 = vmatpush1.bf16.msra.mxu0 %v71
    %81 = vmatprep.subr.bf16.mxu0 0
    %82 = vmatpush1.bf16.msra.mxu0 %v72
    %83 = vmatprep.subr.bf16.mxu0 0
    %84 = vmatpush1.bf16.msra.mxu0 0
    %85 = vmatprep.subr.bf16.mxu0 0
    %86 = vmatpush1.bf16.msra.mxu0 0
    %87 = vmatprep.subr.bf16.mxu0 0
    %88 = vmatpush1.bf16.msra.mxu0 0
    %89 = vmatprep.subr.bf16.mxu0 0
    %90 = vmatpush1.bf16.msra.mxu0 0
    %91 = vmatprep.subr.bf16.mxu0 0
    %92 = vmatpush1.bf16.msra.mxu0 0
    %93 = vmatprep.subr.bf16.mxu0 0
    %94 = vmatpush1.bf16.msra.mxu0 0
    %95 = vmatprep.subr.bf16.mxu0 0
    %96 = vmatpush1.bf16.msra.mxu0 0
    %97 = vmatprep.subr.bf16.mxu0 0
    %98 = vmatpush1.bf16.msra.mxu0 0
    %99 = vmatprep.subr.bf16.mxu0 0
    %100 = vmatpush1.bf16.msra.mxu0 0
    %101 = vmatprep.subr.bf16.mxu0 0
    %102 = vmatpush1.bf16.msra.mxu0 0
    %103 = vmatprep.subr.bf16.mxu0 0
    %104 = vmatpush1.bf16.msra.mxu0 0
    %105 = vmatprep.subr.bf16.mxu0 0
    %106 = vmatpush1.bf16.msra.mxu0 0
    %107 = vmatprep.subr.bf16.mxu0 0
    %108 = vmatpush1.bf16.msra.mxu0 0
    %109 = vmatprep.subr.bf16.mxu0 0
    %110 = vmatpush1.bf16.msra.mxu0 0
    %111 = vmatprep.mubr.bf16.mxu0 0
    %112 = vmatmul.mubr.bf16.gmra.mrb[0].mxu0 %v77
    %v113 = vpop.f32.mrb[0].mxu0
    %v114 = vadd.f32 %v61, %v113
    %v115 = vpop.f32.mrb[0].mxu0
    %v116 = vpop.f32.mrb[0].mxu0
    %v117 = vpop.f32.mrb[0].mxu0
    %118 = vdwg.mxu0
    %v119 = vadd.f32 %v56, %v114
    %v120 = vxor.u32 %v119, 2147483648
    %v121 = vmul.f32 %v120, 1.442695
    %v122 = vpow.pop %v121
    %v123 = vadd.f32 %v122, 1.0
    %v124 = vrcp.pop %v123
    %v125 = vmul.f32 1.0, %v124
    %127 = vrot.lane.b32.xlu0 %v114, 64
    %v128 = vpop.permute.xlu0 %127
    %v130 = vmul.f32 %v125, %v128
    %132 = vrot.lane.b32.xlu0 %v130, 64
    %v133 = vpop.permute.xlu0 %132
    %v135 = vadd.f32 %v56, %v133
    %v136 = vtanh.pop %v135
    %v137 = vsub.f32 0.0, %v136
    %139 = vrot.lane.b32.xlu0 %v137, 96
    %v140 = vpop.permute.xlu0 %139
    %v142 = vmul.f32 %v125, %v140
    %144 = vrot.lane.b32.xlu0 %v142, 32
    %v145 = vpop.permute.xlu0 %144
    %v147 = vadd.f32 %v136, %v145
    %s148 = sld [smem:[#allocation2 + $0x1]]
    %s149 = scalar_lea.vmem %s1, %s148
    %v150 = vld [vmem:[%s149] sm:$0x1]
    %s151 = sld [smem:[#allocation2 + $0x81]]
    %s152 = scalar_lea.vmem %s1, %s151
    %v153 = vld [vmem:[%s152] sm:$0x1]
    %v155 = vlaneseq
    %v156 = vshrl.u32 %v155, 7
    %v157 = vsub.s32 0, %v156
    %v158 = vrot.slane %v153, %v157
    %v160 = vsel %vm55, %v150, %v158
    %v161 = vpack.c.bf16 %v147, %v147
    %163 = vrot.lane.b32.xlu0 %v161, 64
    %v164 = vpop.permute.xlu0 %163
    %v166 = vsel %vm75, %v164, 0
    %168 = vmatprep.subr.bf16.mxu0 0
    %169 = vmatpush1.bf16.msra.mxu0 %v71
    %170 = vmatprep.subr.bf16.mxu0 0
    %171 = vmatpush1.bf16.msra.mxu0 %v72
    %172 = vmatprep.subr.bf16.mxu0 0
    %173 = vmatpush1.bf16.msra.mxu0 0
    %174 = vmatprep.subr.bf16.mxu0 0
    %175 = vmatpush1.bf16.msra.mxu0 0
    %176 = vmatprep.subr.bf16.mxu0 0
    %177 = vmatpush1.bf16.msra.mxu0 0
    %178 = vmatprep.subr.bf16.mxu0 0
    %179 = vmatpush1.bf16.msra.mxu0 0
    %180 = vmatprep.subr.bf16.mxu0 0
    %181 = vmatpush1.bf16.msra.mxu0 0
    %182 = vmatprep.subr.bf16.mxu0 0
    %183 = vmatpush1.bf16.msra.mxu0 0
    %184 = vmatprep.subr.bf16.mxu0 0
    %185 = vmatpush1.bf16.msra.mxu0 0
    %186 = vmatprep.subr.bf16.mxu0 0
    %187 = vmatpush1.bf16.msra.mxu0 0
    %188 = vmatprep.subr.bf16.mxu0 0
    %189 = vmatpush1.bf16.msra.mxu0 0
    %190 = vmatprep.subr.bf16.mxu0 0
    %191 = vmatpush1.bf16.msra.mxu0 0
    %192 = vmatprep.subr.bf16.mxu0 0
    %193 = vmatpush1.bf16.msra.mxu0 0
    %194 = vmatprep.subr.bf16.mxu0 0
    %195 = vmatpush1.bf16.msra.mxu0 0
    %196 = vmatprep.subr.bf16.mxu0 0
    %197 = vmatpush1.bf16.msra.mxu0 0
    %198 = vmatprep.subr.bf16.mxu0 0
    %199 = vmatpush1.bf16.msra.mxu0 0
    %200 = vmatprep.mubr.bf16.mxu0 0
    %201 = vmatmul.mubr.bf16.gmra.mrb[0].mxu0 %v166
    %v202 = vpop.f32.mrb[0].mxu0
    %v203 = vadd.f32 %v61, %v202
    %v204 = vpop.f32.mrb[0].mxu0
    %v205 = vpop.f32.mrb[0].mxu0
    %v206 = vpop.f32.mrb[0].mxu0
    %207 = vdwg.mxu0
    %v208 = vadd.f32 %v160, %v203
    %v209 = vxor.u32 %v208, 2147483648
    %v210 = vmul.f32 %v209, 1.442695
    %v211 = vpow.pop %v210
    %v212 = vadd.f32 %v211, 1.0
    %v213 = vrcp.pop %v212
    %v214 = vmul.f32 1.0, %v213
    %216 = vrot.lane.b32.xlu0 %v203, 64
    %v217 = vpop.permute.xlu0 %216
    %v219 = vmul.f32 %v214, %v217
    %221 = vrot.lane.b32.xlu0 %v219, 64
    %v222 = vpop.permute.xlu0 %221
    %v224 = vadd.f32 %v160, %v222
    %v225 = vtanh.pop %v224
    %v226 = vsub.f32 %v147, %v225
    %228 = vrot.lane.b32.xlu0 %v226, 96
    %v229 = vpop.permute.xlu0 %228
    %v231 = vmul.f32 %v214, %v229
    %233 = vrot.lane.b32.xlu0 %v231, 32
    %v234 = vpop.permute.xlu0 %233
    %v236 = vadd.f32 %v225, %v234
    %s237 = sld [smem:[#allocation2 + $0x2]]
    %s238 = scalar_lea.vmem %s1, %s237
    %v239 = vld [vmem:[%s238] sm:$0x1]
    %s240 = sld [smem:[#allocation2 + $0x82]]
    %s241 = scalar_lea.vmem %s1, %s240
    %v242 = vld [vmem:[%s241] sm:$0x1]
    %v244 = vlaneseq
    %v245 = vshrl.u32 %v244, 7
    %v246 = vsub.s32 0, %v245
    %v247 = vrot.slane %v242, %v246
    %v249 = vsel %vm55, %v239, %v247
    %v250 = vpack.c.bf16 %v236, %v236
    %252 = vrot.lane.b32.xlu0 %v250, 64
    %v253 = vpop.permute.xlu0 %252
    %v255 = vsel %vm75, %v253, 0
    %257 = vmatprep.subr.bf16.mxu0 0
    %258 = vmatpush1.bf16.msra.mxu0 %v71
    %259 = vmatprep.subr.bf16.mxu0 0
    %260 = vmatpush1.bf16.msra.mxu0 %v72
    %261 = vmatprep.subr.bf16.mxu0 0
    %262 = vmatpush1.bf16.msra.mxu0 0
    %263 = vmatprep.subr.bf16.mxu0 0
    %264 = vmatpush1.bf16.msra.mxu0 0
    %265 = vmatprep.subr.bf16.mxu0 0
    %266 = vmatpush1.bf16.msra.mxu0 0
    %267 = vmatprep.subr.bf16.mxu0 0
    %268 = vmatpush1.bf16.msra.mxu0 0
    %269 = vmatprep.subr.bf16.mxu0 0
    %270 = vmatpush1.bf16.msra.mxu0 0
    %271 = vmatprep.subr.bf16.mxu0 0
    %272 = vmatpush1.bf16.msra.mxu0 0
    %273 = vmatprep.subr.bf16.mxu0 0
    %274 = vmatpush1.bf16.msra.mxu0 0
    %275 = vmatprep.subr.bf16.mxu0 0
    %276 = vmatpush1.bf16.msra.mxu0 0
    %277 = vmatprep.subr.bf16.mxu0 0
    %278 = vmatpush1.bf16.msra.mxu0 0
    %279 = vmatprep.subr.bf16.mxu0 0
    %280 = vmatpush1.bf16.msra.mxu0 0
    %281 = vmatprep.subr.bf16.mxu0 0
    %282 = vmatpush1.bf16.msra.mxu0 0
    %283 = vmatprep.subr.bf16.mxu0 0
    %284 = vmatpush1.bf16.msra.mxu0 0
    %285 = vmatprep.subr.bf16.mxu0 0
    %286 = vmatpush1.bf16.msra.mxu0 0
    %287 = vmatprep.subr.bf16.mxu0 0
    %288 = vmatpush1.bf16.msra.mxu0 0
    %289 = vmatprep.mubr.bf16.mxu0 0
    %290 = vmatmul.mubr.bf16.gmra.mrb[0].mxu0 %v255
    %v291 = vpop.f32.mrb[0].mxu0
    %v292 = vadd.f32 %v61, %v291
    %v293 = vpop.f32.mrb[0].mxu0
    %v294 = vpop.f32.mrb[0].mxu0
    %v295 = vpop.f32.mrb[0].mxu0
    %296 = vdwg.mxu0
    %v297 = vadd.f32 %v249, %v292
    %v298 = vxor.u32 %v297, 2147483648
    %v299 = vmul.f32 %v298, 1.442695
    %v300 = vpow.pop %v299
    %v301 = vadd.f32 %v300, 1.0
    %v302 = vrcp.pop %v301
    %v303 = vmul.f32 1.0, %v302
    %305 = vrot.lane.b32.xlu0 %v292, 64
    %v306 = vpop.permute.xlu0 %305
    %v308 = vmul.f32 %v303, %v306
    %310 = vrot.lane.b32.xlu0 %v308, 64
    %v311 = vpop.permute.xlu0 %310
    %v313 = vadd.f32 %v249, %v311
    %v314 = vtanh.pop %v313
    %v315 = vsub.f32 %v236, %v314
    %317 = vrot.lane.b32.xlu0 %v315, 96
    %v318 = vpop.permute.xlu0 %317
    %v320 = vmul.f32 %v303, %v318
    %322 = vrot.lane.b32.xlu0 %v320, 32
    %v323 = vpop.permute.xlu0 %322
    %v325 = vadd.f32 %v314, %v323
    %s326 = sld [smem:[#allocation2 + $0x3]]
    %s327 = scalar_lea.vmem %s1, %s326
    %v328 = vld [vmem:[%s327] sm:$0x1]
    %s329 = sld [smem:[#allocation2 + $0x83]]
    %s330 = scalar_lea.vmem %s1, %s329
    %v331 = vld [vmem:[%s330] sm:$0x1]
    %v333 = vlaneseq
    %v334 = vshrl.u32 %v333, 7
    %v335 = vsub.s32 0, %v334
    %v336 = vrot.slane %v331, %v335
    %v338 = vsel %vm55, %v328, %v336
    %v339 = vpack.c.bf16 %v325, %v325
    %341 = vrot.lane.b32.xlu0 %v339, 64
    %v342 = vpop.permute.xlu0 %341
    %v344 = vsel %vm75, %v342, 0
    %346 = vmatprep.subr.bf16.mxu0 0
    %347 = vmatpush1.bf16.msra.mxu0 %v71
    %348 = vmatprep.subr.bf16.mxu0 0
    %349 = vmatpush1.bf16.msra.mxu0 %v72
    %350 = vmatprep.subr.bf16.mxu0 0
    %351 = vmatpush1.bf16.msra.mxu0 0
    %352 = vmatprep.subr.bf16.mxu0 0
    %353 = vmatpush1.bf16.msra.mxu0 0
    %354 = vmatprep.subr.bf16.mxu0 0
    %355 = vmatpush1.bf16.msra.mxu0 0
    %356 = vmatprep.subr.bf16.mxu0 0
    %357 = vmatpush1.bf16.msra.mxu0 0
    %358 = vmatprep.subr.bf16.mxu0 0
    %359 = vmatpush1.bf16.msra.mxu0 0
    %360 = vmatprep.subr.bf16.mxu0 0
    %361 = vmatpush1.bf16.msra.mxu0 0
    %362 = vmatprep.subr.bf16.mxu0 0
    %363 = vmatpush1.bf16.msra.mxu0 0
    %364 = vmatprep.subr.bf16.mxu0 0
    %365 = vmatpush1.bf16.msra.mxu0 0
    %366 = vmatprep.subr.bf16.mxu0 0
    %367 = vmatpush1.bf16.msra.mxu0 0
    %368 = vmatprep.subr.bf16.mxu0 0
    %369 = vmatpush1.bf16.msra.mxu0 0
    %370 = vmatprep.subr.bf16.mxu0 0
    %371 = vmatpush1.bf16.msra.mxu0 0
    %372 = vmatprep.subr.bf16.mxu0 0
    %373 = vmatpush1.bf16.msra.mxu0 0
    %374 = vmatprep.subr.bf16.mxu0 0
    %375 = vmatpush1.bf16.msra.mxu0 0
    %376 = vmatprep.subr.bf16.mxu0 0
    %377 = vmatpush1.bf16.msra.mxu0 0
    %378 = vmatprep.mubr.bf16.mxu0 0
    %379 = vmatmul.mubr.bf16.gmra.mrb[0].mxu0 %v344
    %v380 = vpop.f32.mrb[0].mxu0
    %v381 = vadd.f32 %v61, %v380
    %v382 = vpop.f32.mrb[0].mxu0
    %v383 = vpop.f32.mrb[0].mxu0
    %v384 = vpop.f32.mrb[0].mxu0
    %385 = vdwg.mxu0
    %v386 = vadd.f32 %v338, %v381
    %v387 = vxor.u32 %v386, 2147483648
    %v388 = vmul.f32 %v387, 1.442695
    %v389 = vpow.pop %v388
    %v390 = vadd.f32 %v389, 1.0
    %v391 = vrcp.pop %v390
    %v392 = vmul.f32 1.0, %v391
    %394 = vrot.lane.b32.xlu0 %v381, 64
    %v395 = vpop.permute.xlu0 %394
    %v397 = vmul.f32 %v392, %v395
    %399 = vrot.lane.b32.xlu0 %v397, 64
    %v400 = vpop.permute.xlu0 %399
    %v402 = vadd.f32 %v338, %v400
    %v403 = vtanh.pop %v402
    %v404 = vsub.f32 %v325, %v403
    %406 = vrot.lane.b32.xlu0 %v404, 96
    %v407 = vpop.permute.xlu0 %406
    %v409 = vmul.f32 %v392, %v407
    %411 = vrot.lane.b32.xlu0 %v409, 32
    %v412 = vpop.permute.xlu0 %411
    %v414 = vadd.f32 %v403, %v412
    %s415 = sld [smem:[#allocation2 + $0x4]]
    %s416 = scalar_lea.vmem %s1, %s415
    %v417 = vld [vmem:[%s416] sm:$0x1]
    %s418 = sld [smem:[#allocation2 + $0x84]]
    %s419 = scalar_lea.vmem %s1, %s418
    %v420 = vld [vmem:[%s419] sm:$0x1]
    %v422 = vlaneseq
    %v423 = vshrl.u32 %v422, 7
    %v424 = vsub.s32 0, %v423
    %v425 = vrot.slane %v420, %v424
    %v427 = vsel %vm55, %v417, %v425
    %v428 = vpack.c.bf16 %v414, %v414
    %430 = vrot.lane.b32.xlu0 %v428, 64
    %v431 = vpop.permute.xlu0 %430
    %v433 = vsel %vm75, %v431, 0
    %435 = vmatprep.subr.bf16.mxu0 0
    %436 = vmatpush1.bf16.msra.mxu0 %v71
    %437 = vmatprep.subr.bf16.mxu0 0
    %438 = vmatpush1.bf16.msra.mxu0 %v72
    %439 = vmatprep.subr.bf16.mxu0 0
    %440 = vmatpush1.bf16.msra.mxu0 0
    %441 = vmatprep.subr.bf16.mxu0 0
    %442 = vmatpush1.bf16.msra.mxu0 0
    %443 = vmatprep.subr.bf16.mxu0 0
    %444 = vmatpush1.bf16.msra.mxu0 0
    %445 = vmatprep.subr.bf16.mxu0 0
    %446 = vmatpush1.bf16.msra.mxu0 0
    %447 = vmatprep.subr.bf16.mxu0 0
    %448 = vmatpush1.bf16.msra.mxu0 0
    %449 = vmatprep.subr.bf16.mxu0 0
    %450 = vmatpush1.bf16.msra.mxu0 0
    %451 = vmatprep.subr.bf16.mxu0 0
    %452 = vmatpush1.bf16.msra.mxu0 0
    %453 = vmatprep.subr.bf16.mxu0 0
    %454 = vmatpush1.bf16.msra.mxu0 0
    %455 = vmatprep.subr.bf16.mxu0 0
    %456 = vmatpush1.bf16.msra.mxu0 0
    %457 = vmatprep.subr.bf16.mxu0 0
    %458 = vmatpush1.bf16.msra.mxu0 0
    %459 = vmatprep.subr.bf16.mxu0 0
    %460 = vmatpush1.bf16.msra.mxu0 0
    %461 = vmatprep.subr.bf16.mxu0 0
    %462 = vmatpush1.bf16.msra.mxu0 0
    %463 = vmatprep.subr.bf16.mxu0 0
    %464 = vmatpush1.bf16.msra.mxu0 0
    %465 = vmatprep.subr.bf16.mxu0 0
    %466 = vmatpush1.bf16.msra.mxu0 0
    %467 = vmatprep.mubr.bf16.mxu0 0
    %468 = vmatmul.mubr.bf16.gmra.mrb[0].mxu0 %v433
    %v469 = vpop.f32.mrb[0].mxu0
    %v470 = vadd.f32 %v61, %v469
    %v471 = vpop.f32.mrb[0].mxu0
    %v472 = vpop.f32.mrb[0].mxu0
    %v473 = vpop.f32.mrb[0].mxu0
    %474 = vdwg.mxu0
    %v475 = vadd.f32 %v427, %v470
    %v476 = vxor.u32 %v475, 2147483648
    %v477 = vmul.f32 %v476, 1.442695
    %v478 = vpow.pop %v477
    %v479 = vadd.f32 %v478, 1.0
    %v480 = vrcp.pop %v479
    %v481 = vmul.f32 1.0, %v480
    %483 = vrot.lane.b32.xlu0 %v470, 64
    %v484 = vpop.permute.xlu0 %483
    %v486 = vmul.f32 %v481, %v484
    %488 = vrot.lane.b32.xlu0 %v486, 64
    %v489 = vpop.permute.xlu0 %488
    %v491 = vadd.f32 %v427, %v489
    %v492 = vtanh.pop %v491
    %v493 = vsub.f32 %v414, %v492
    %495 = vrot.lane.b32.xlu0 %v493, 96
    %v496 = vpop.permute.xlu0 %495
    %v498 = vmul.f32 %v481, %v496
    %500 = vrot.lane.b32.xlu0 %v498, 32
    %v501 = vpop.permute.xlu0 %500
    %v503 = vadd.f32 %v492, %v501
    %s504 = sld [smem:[#allocation2 + $0x5]]
    %s505 = scalar_lea.vmem %s1, %s504
    %v506 = vld [vmem:[%s505] sm:$0x1]
    %s507 = sld [smem:[#allocation2 + $0x85]]
    %s508 = scalar_lea.vmem %s1, %s507
    %v509 = vld [vmem:[%s508] sm:$0x1]
    %v511 = vlaneseq
    %v512 = vshrl.u32 %v511, 7
    %v513 = vsub.s32 0, %v512
    %v514 = vrot.slane %v509, %v513
    %v516 = vsel %vm55, %v506, %v514
    %v517 = vpack.c.bf16 %v503, %v503
    %519 = vrot.lane.b32.xlu0 %v517, 64
    %v520 = vpop.permute.xlu0 %519
    %v522 = vsel %vm75, %v520, 0
    %524 = vmatprep.subr.bf16.mxu0 0
    %525 = vmatpush1.bf16.msra.mxu0 %v71
    %526 = vmatprep.subr.bf16.mxu0 0
    %527 = vmatpush1.bf16.msra.mxu0 %v72
    %528 = vmatprep.subr.bf16.mxu0 0
    %529 = vmatpush1.bf16.msra.mxu0 0
    %530 = vmatprep.subr.bf16.mxu0 0
    %531 = vmatpush1.bf16.msra.mxu0 0
    %532 = vmatprep.subr.bf16.mxu0 0
    %533 = vmatpush1.bf16.msra.mxu0 0
    %534 = vmatprep.subr.bf16.mxu0 0
    %535 = vmatpush1.bf16.msra.mxu0 0
    %536 = vmatprep.subr.bf16.mxu0 0
    %537 = vmatpush1.bf16.msra.mxu0 0
    %538 = vmatprep.subr.bf16.mxu0 0
    %539 = vmatpush1.bf16.msra.mxu0 0
    %540 = vmatprep.subr.bf16.mxu0 0
    %541 = vmatpush1.bf16.msra.mxu0 0
    %542 = vmatprep.subr.bf16.mxu0 0
    %543 = vmatpush1.bf16.msra.mxu0 0
    %544 = vmatprep.subr.bf16.mxu0 0
    %545 = vmatpush1.bf16.msra.mxu0 0
    %546 = vmatprep.subr.bf16.mxu0 0
    %547 = vmatpush1.bf16.msra.mxu0 0
    %548 = vmatprep.subr.bf16.mxu0 0
    %549 = vmatpush1.bf16.msra.mxu0 0
    %550 = vmatprep.subr.bf16.mxu0 0
    %551 = vmatpush1.bf16.msra.mxu0 0
    %552 = vmatprep.subr.bf16.mxu0 0
    %553 = vmatpush1.bf16.msra.mxu0 0
    %554 = vmatprep.subr.bf16.mxu0 0
    %555 = vmatpush1.bf16.msra.mxu0 0
    %556 = vmatprep.mubr.bf16.mxu0 0
    %557 = vmatmul.mubr.bf16.gmra.mrb[0].mxu0 %v522
    %v558 = vpop.f32.mrb[0].mxu0
    %v559 = vadd.f32 %v61, %v558
    %v560 = vpop.f32.mrb[0].mxu0
    %v561 = vpop.f32.mrb[0].mxu0
    %v562 = vpop.f32.mrb[0].mxu0
    %563 = vdwg.mxu0
    %v564 = vadd.f32 %v516, %v559
    %v565 = vxor.u32 %v564, 2147483648
    %v566 = vmul.f32 %v565, 1.442695
    %v567 = vpow.pop %v566
    %v568 = vadd.f32 %v567, 1.0
    %v569 = vrcp.pop %v568
    %v570 = vmul.f32 1.0, %v569
    %572 = vrot.lane.b32.xlu0 %v559, 64
    %v573 = vpop.permute.xlu0 %572
    %v575 = vmul.f32 %v570, %v573
    %577 = vrot.lane.b32.xlu0 %v575, 64
    %v578 = vpop.permute.xlu0 %577
    %v580 = vadd.f32 %v516, %v578
    %v581 = vtanh.pop %v580
    %v582 = vsub.f32 %v503, %v581
    %584 = vrot.lane.b32.xlu0 %v582, 96
    %v585 = vpop.permute.xlu0 %584
    %v587 = vmul.f32 %v570, %v585
    %589 = vrot.lane.b32.xlu0 %v587, 32
    %v590 = vpop.permute.xlu0 %589
    %v592 = vadd.f32 %v581, %v590
    %s593 = sld [smem:[#allocation2 + $0x6]]
    %s594 = scalar_lea.vmem %s1, %s593
    %v595 = vld [vmem:[%s594] sm:$0x1]
    %s596 = sld [smem:[#allocation2 + $0x86]]
    %s597 = scalar_lea.vmem %s1, %s596
    %v598 = vld [vmem:[%s597] sm:$0x1]
    %v600 = vlaneseq
    %v601 = vshrl.u32 %v600, 7
    %v602 = vsub.s32 0, %v601
    %v603 = vrot.slane %v598, %v602
    %v605 = vsel %vm55, %v595, %v603
    %v606 = vpack.c.bf16 %v592, %v592
    %608 = vrot.lane.b32.xlu0 %v606, 64
    %v609 = vpop.permute.xlu0 %608
    %v611 = vsel %vm75, %v609, 0
    %613 = vmatprep.subr.bf16.mxu0 0
    %614 = vmatpush1.bf16.msra.mxu0 %v71
    %615 = vmatprep.subr.bf16.mxu0 0
    %616 = vmatpush1.bf16.msra.mxu0 %v72
    %617 = vmatprep.subr.bf16.mxu0 0
    %618 = vmatpush1.bf16.msra.mxu0 0
    %619 = vmatprep.subr.bf16.mxu0 0
    %620 = vmatpush1.bf16.msra.mxu0 0
    %621 = vmatprep.subr.bf16.mxu0 0
    %622 = vmatpush1.bf16.msra.mxu0 0
    %623 = vmatprep.subr.bf16.mxu0 0
    %624 = vmatpush1.bf16.msra.mxu0 0
    %625 = vmatprep.subr.bf16.mxu0 0
    %626 = vmatpush1.bf16.msra.mxu0 0
    %627 = vmatprep.subr.bf16.mxu0 0
    %628 = vmatpush1.bf16.msra.mxu0 0
    %629 = vmatprep.subr.bf16.mxu0 0
    %630 = vmatpush1.bf16.msra.mxu0 0
    %631 = vmatprep.subr.bf16.mxu0 0
    %632 = vmatpush1.bf16.msra.mxu0 0
    %633 = vmatprep.subr.bf16.mxu0 0
    %634 = vmatpush1.bf16.msra.mxu0 0
    %635 = vmatprep.subr.bf16.mxu0 0
    %636 = vmatpush1.bf16.msra.mxu0 0
    %637 = vmatprep.subr.bf16.mxu0 0
    %638 = vmatpush1.bf16.msra.mxu0 0
    %639 = vmatprep.subr.bf16.mxu0 0
    %640 = vmatpush1.bf16.msra.mxu0 0
    %641 = vmatprep.subr.bf16.mxu0 0
    %642 = vmatpush1.bf16.msra.mxu0 0
    %643 = vmatprep.subr.bf16.mxu0 0
    %644 = vmatpush1.bf16.msra.mxu0 0
    %645 = vmatprep.mubr.bf16.mxu0 0
    %646 = vmatmul.mubr.bf16.gmra.mrb[0].mxu0 %v611
    %v647 = vpop.f32.mrb[0].mxu0
    %v648 = vadd.f32 %v61, %v647
    %v649 = vpop.f32.mrb[0].mxu0
    %v650 = vpop.f32.mrb[0].mxu0
    %v651 = vpop.f32.mrb[0].mxu0
    %652 = vdwg.mxu0
    %v653 = vadd.f32 %v605, %v648
    %v654 = vxor.u32 %v653, 2147483648
    %v655 = vmul.f32 %v654, 1.442695
    %v656 = vpow.pop %v655
    %v657 = vadd.f32 %v656, 1.0
    %v658 = vrcp.pop %v657
    %v659 = vmul.f32 1.0, %v658
    %661 = vrot.lane.b32.xlu0 %v648, 64
    %v662 = vpop.permute.xlu0 %661
    %v664 = vmul.f32 %v659, %v662
    %666 = vrot.lane.b32.xlu0 %v664, 64
    %v667 = vpop.permute.xlu0 %666
    %v669 = vadd.f32 %v605, %v667
    %v670 = vtanh.pop %v669
    %v671 = vsub.f32 %v592, %v670
    %673 = vrot.lane.b32.xlu0 %v671, 96
    %v674 = vpop.permute.xlu0 %673
    %v676 = vmul.f32 %v659, %v674
    %678 = vrot.lane.b32.xlu0 %v676, 32
    %v679 = vpop.permute.xlu0 %678
    %v681 = vadd.f32 %v670, %v679
    %s682 = sld [smem:[#allocation2 + $0x7]]
    %s683 = scalar_lea.vmem %s1, %s682
    %v684 = vld [vmem:[%s683] sm:$0x1]
    %s685 = sld [smem:[#allocation2 + $0x87]]
    %s686 = scalar_lea.vmem %s1, %s685
    %v687 = vld [vmem:[%s686] sm:$0x1]
    %v689 = vlaneseq
    %v690 = vshrl.u32 %v689, 7
    %v691 = vsub.s32 0, %v690
    %v692 = vrot.slane %v687, %v691
    %v694 = vsel %vm55, %v684, %v692
    %v695 = vpack.c.bf16 %v681, %v681
    %697 = vrot.lane.b32.xlu0 %v695, 64
    %v698 = vpop.permute.xlu0 %697
    %v700 = vsel %vm75, %v698, 0
    %702 = vmatprep.subr.bf16.mxu0 0
    %703 = vmatpush1.bf16.msra.mxu0 %v71
    %704 = vmatprep.subr.bf16.mxu0 0
    %705 = vmatpush1.bf16.msra.mxu0 %v72
    %706 = vmatprep.subr.bf16.mxu0 0
    %707 = vmatpush1.bf16.msra.mxu0 0
    %708 = vmatprep.subr.bf16.mxu0 0
    %709 = vmatpush1.bf16.msra.mxu0 0
    %710 = vmatprep.subr.bf16.mxu0 0
    %711 = vmatpush1.bf16.msra.mxu0 0
    %712 = vmatprep.subr.bf16.mxu0 0
    %713 = vmatpush1.bf16.msra.mxu0 0
    %714 = vmatprep.subr.bf16.mxu0 0
    %715 = vmatpush1.bf16.msra.mxu0 0
    %716 = vmatprep.subr.bf16.mxu0 0
    %717 = vmatpush1.bf16.msra.mxu0 0
    %718 = vmatprep.subr.bf16.mxu0 0
    %719 = vmatpush1.bf16.msra.mxu0 0
    %720 = vmatprep.subr.bf16.mxu0 0
    %721 = vmatpush1.bf16.msra.mxu0 0
    %722 = vmatprep.subr.bf16.mxu0 0
    %723 = vmatpush1.bf16.msra.mxu0 0
    %724 = vmatprep.subr.bf16.mxu0 0
    %725 = vmatpush1.bf16.msra.mxu0 0
    %726 = vmatprep.subr.bf16.mxu0 0
    %727 = vmatpush1.bf16.msra.mxu0 0
    %728 = vmatprep.subr.bf16.mxu0 0
    %729 = vmatpush1.bf16.msra.mxu0 0
    %730 = vmatprep.subr.bf16.mxu0 0
    %731 = vmatpush1.bf16.msra.mxu0 0
    %732 = vmatprep.subr.bf16.mxu0 0
    %733 = vmatpush1.bf16.msra.mxu0 0
    %734 = vmatprep.mubr.bf16.mxu0 0
    %735 = vmatmul.mubr.bf16.gmra.mrb[0].mxu0 %v700
    %v736 = vpop.f32.mrb[0].mxu0
    %v737 = vadd.f32 %v61, %v736
    %v738 = vpop.f32.mrb[0].mxu0
    %v739 = vpop.f32.mrb[0].mxu0
    %v740 = vpop.f32.mrb[0].mxu0
    %741 = vdwg.mxu0
    %v742 = vadd.f32 %v694, %v737
    %v743 = vxor.u32 %v742, 2147483648
    %v744 = vmul.f32 %v743, 1.442695
    %v745 = vpow.pop %v744
    %v746 = vadd.f32 %v745, 1.0
    %v747 = vrcp.pop %v746
    %v748 = vmul.f32 1.0, %v747
    %750 = vrot.lane.b32.xlu0 %v737, 64
    %v751 = vpop.permute.xlu0 %750
    %v753 = vmul.f32 %v748, %v751
    %755 = vrot.lane.b32.xlu0 %v753, 64
    %v756 = vpop.permute.xlu0 %755
    %v758 = vadd.f32 %v694, %v756
    %v759 = vtanh.pop %v758
    %v760 = vsub.f32 %v681, %v759
    %762 = vrot.lane.b32.xlu0 %v760, 96
    %v763 = vpop.permute.xlu0 %762
    %v765 = vmul.f32 %v748, %v763
    %767 = vrot.lane.b32.xlu0 %v765, 32
    %v768 = vpop.permute.xlu0 %767
    %v770 = vadd.f32 %v759, %v768
    %v771 = vpack.c.bf16 %v770, %v770
    %v772 = vld [vmem:[%s4] sm:$0xf]
    %v773 = vld [vmem:[%s4 + $0x4] sm:$0xf]
    %v774 = vld [vmem:[%s4 + $0x8] sm:$0xf]
    %v775 = vld [vmem:[%s4 + $0xc] sm:$0xf]
    %v776 = vld [vmem:[%s5] sm:$0x1]
    %v778 = vlaneseq
    %v779 = vshrl.u32 %v778, 7
    %v780 = vsub.s32 0, %v779
    %v781 = vrot.slane %v776, %v780
    %784 = vrot.lane.b32.xlu0 %v771, 64
    %v785 = vpop.permute.xlu0 %784
    %v790 = vunpack.c.l.b16 %v772
    %v791 = vunpack.c.l.b16 %v773
    %v792 = vunpack.c.l.b16 %v774
    %v793 = vunpack.c.l.b16 %v775
    %v794 = vpack.c.b16 %v791, %v790
    %v795 = vpack.c.b16 %v793, %v792
    %v799 = vsel %vm75, %v785, 0
    %801 = vmatprep.subr.bf16.mxu0 0
    %802 = vmatpush1.bf16.msra.mxu0 %v794
    %803 = vmatprep.subr.bf16.mxu0 0
    %804 = vmatpush1.bf16.msra.mxu0 %v795
    %805 = vmatprep.subr.bf16.mxu0 0
    %806 = vmatpush1.bf16.msra.mxu0 0
    %807 = vmatprep.subr.bf16.mxu0 0
    %808 = vmatpush1.bf16.msra.mxu0 0
    %809 = vmatprep.subr.bf16.mxu0 0
    %810 = vmatpush1.bf16.msra.mxu0 0
    %811 = vmatprep.subr.bf16.mxu0 0
    %812 = vmatpush1.bf16.msra.mxu0 0
    %813 = vmatprep.subr.bf16.mxu0 0
    %814 = vmatpush1.bf16.msra.mxu0 0
    %815 = vmatprep.subr.bf16.mxu0 0
    %816 = vmatpush1.bf16.msra.mxu0 0
    %817 = vmatprep.subr.bf16.mxu0 0
    %818 = vmatpush1.bf16.msra.mxu0 0
    %819 = vmatprep.subr.bf16.mxu0 0
    %820 = vmatpush1.bf16.msra.mxu0 0
    %821 = vmatprep.subr.bf16.mxu0 0
    %822 = vmatpush1.bf16.msra.mxu0 0
    %823 = vmatprep.subr.bf16.mxu0 0
    %824 = vmatpush1.bf16.msra.mxu0 0
    %825 = vmatprep.subr.bf16.mxu0 0
    %826 = vmatpush1.bf16.msra.mxu0 0
    %827 = vmatprep.subr.bf16.mxu0 0
    %828 = vmatpush1.bf16.msra.mxu0 0
    %829 = vmatprep.subr.bf16.mxu0 0
    %830 = vmatpush1.bf16.msra.mxu0 0
    %831 = vmatprep.subr.bf16.mxu0 0
    %832 = vmatpush1.bf16.msra.mxu0 0
    %833 = vmatprep.mubr.bf16.mxu0 0
    %834 = vmatmul.mubr.bf16.gmra.mrb[0].mxu0 %v799
    %v835 = vpop.f32.mrb[0].mxu0
    %v836 = vadd.f32 %v781, %v835
    %v837 = vpop.f32.mrb[0].mxu0
    %v838 = vpop.f32.mrb[0].mxu0
    %v839 = vpop.f32.mrb[0].mxu0
    %840 = vdwg.mxu0
    %841 = vst [vmem:[#allocation5] sm:$0x3] %v836
    // Predicated region
    $region30: #{t_gru_forward.1} parent=1 // pred_check
      _
    $region31: #{t_gru_forward.1} parent=1 // pred_check_branch
      %843 = sbr.rel (0) target = $region33
    $region32: #{t_gru_forward.1} parent=1 // pred_region
      %s845 = ssub.s32 32, 32
      %846 = vsyncadd [#allocation3], %s845
      %s848 = sshll.u32 [#allocation5], 4
      %s849 = int_to_ptr.vmem [resolvable:$true] %s848
      %851 = dma.vmem_to_hbm [thread:$0]  %s849, 32, %s6, [#allocation3]
    $region33: #{t_gru_forward.1} parent=1 // pred_fallthru
      _
    // Predicated region
    $region34: #{t_gru_forward.1} parent=1 // pred_check
      _
    $region35: #{t_gru_forward.1} parent=1 // pred_check_branch
      %853 = sbr.rel (0) target = $region37
    $region36: #{t_gru_forward.1} parent=1 // pred_region
      %854 = dma.done [#allocation3], 32
    $region37: #{t_gru_forward.1} parent=1 // pred_fallthru
      _
    %855 = vsyncpa [#allocation3], 1
    %856 = vsyncpa [#allocation4], 1

</llo_original>
